<compile_context>
chip_gen: v7x
topology: tpu7x:2x2x1
jax: 0.10.0
libtpu: 0.0.40
codegen_flags: <defaults>
</compile_context>

<pallas_src>
import math

import jax
import jax.numpy as jnp
from jax.experimental import pallas as pl
from jax.experimental.pallas import tpu as pltpu


def _round_up(x, m):
    return ((x + m - 1) // m) * m


def _choose_tm(M, tm_max=1024):
    # Small batches: one full-dim block (block shape == array shape is always
    # legal; the whole call is launch-overhead-bound anyway).
    if M <= 256:
        return M
    # Larger batches: tm must be a multiple of 128 so the lane-dense (O, tm)
    # output block stores unmasked; keep >= 2 grid steps (v7x has 2 TCs) and
    # cap at tm_max to amortize per-step overhead without ballooning VMEM.
    return min(tm_max, _round_up(pl.cdiv(M, 2), 128))


# ----------------------------------------------------------------------------
# Pallas kernel: fused (Linear + folded BN) -> LeakyReLU -> Linear -> Sigmoid
# producing a lane-dense (O, tm) output block.
# ----------------------------------------------------------------------------
def _mlp_surv_kernel(x_ref, w1_ref, b1_ref, w2_ref, b2_ref, ot_ref):
    # fc1 with bn1 (pre) and bn2 (post) folded in. bf16 MXU inputs, f32 acc.
    h = jnp.dot(x_ref[...], w1_ref[...], preferred_element_type=jnp.float32)
    h = h + b1_ref[...]
    # LeakyReLU (PyTorch default negative_slope = 0.01).
    h = jnp.where(h >= 0, h, 0.01 * h)
    # fc2, computed directly in transposed (lane-dense) orientation:
    #   (O, F) contracted with (tm, F) over F  ->  (O, tm)
    o_t = jax.lax.dot_general(
        w2_ref[...], h,
        dimension_numbers=(((1,), (1,)), ((), ())),
        preferred_element_type=jnp.float32)
    # fc2 bias from SMEM scalars (O is static and tiny, typically 1).
    O = o_t.shape[0]
    if O == 1:
        o_t = o_t + b2_ref[0]
    else:
        o_t = jnp.concatenate(
            [o_t[j:j + 1, :] + b2_ref[j] for j in range(O)], axis=0)
    ot_ref[...] = jax.nn.sigmoid(o_t).astype(ot_ref.dtype)


def mlp_surv_pallas(x, w1f, b1f, w2of, b2f, *, tm_max=1024):
    """x: (M, K) -> sigmoid(leaky_relu(x @ w1f + b1f) @ w2of.T + b2f): (M, O).

    w1f: (K, F) with bn1/bn2 folded in, b1f: (F,), w2of: (O, F) (PyTorch
    orientation), b2f: (O,).
    """
    M, K = x.shape
    F = w1f.shape[1]
    O = w2of.shape[0]

    tm = _choose_tm(M, tm_max)
    grid_m = pl.cdiv(M, tm)          # partial last block handled by Pallas

    # bf16 inputs for the first matmul (halves the dominant x HBM stream);
    # accumulation and the whole epilogue stay in f32 (v5e has no bf16 VPU).
    x_bf = x.astype(jnp.bfloat16)
    w1_bf = w1f.astype(jnp.bfloat16)
    b1f2 = b1f.reshape(1, F).astype(jnp.float32)

    out_t = pl.pallas_call(
        _mlp_surv_kernel,
        out_shape=jax.ShapeDtypeStruct((O, M), jnp.float32),
        grid_spec=pltpu.PrefetchScalarGridSpec(
            num_scalar_prefetch=0,
            grid=(grid_m,),
            in_specs=[
                pl.BlockSpec((tm, K), lambda i: (i, 0)),   # x tile (bf16)
                pl.BlockSpec((K, F), lambda i: (0, 0)),    # folded fc1 weight
                pl.BlockSpec((1, F), lambda i: (0, 0)),    # folded fc1 bias
                pl.BlockSpec((O, F), lambda i: (0, 0)),    # fc2 weight (O, F)
                pl.BlockSpec(memory_space=pltpu.MemorySpace.SMEM),  # fc2 bias
            ],
            out_specs=pl.BlockSpec((O, tm), lambda i: (0, i)),  # lane-dense
        ),
        compiler_params=pltpu.CompilerParams(
            dimension_semantics=("parallel",)),
    )(x_bf, w1_bf, b1f2, w2of.astype(jnp.float32), b2f.astype(jnp.float32))
    # Tiny (O, M) -> (M, O) transpose host-side (for O == 1 it is a reshape).
    return out_t.T


# ----------------------------------------------------------------------------
# Host-side parameter construction + BN folding (one-time, negligible cost).
# ----------------------------------------------------------------------------
def make_params(key, in_size, fil_num, output_shape=1):
    k1, k2, k3, k4, kb = jax.random.split(key, 5)
    bound1 = 1.0 / math.sqrt(in_size)
    bound2 = 1.0 / math.sqrt(fil_num)
    kg1, kb1, km1, kv1, kg2, kb2, km2, kv2 = jax.random.split(kb, 8)
    return {
        "fc1_w": jax.random.uniform(k1, (fil_num, in_size), jnp.float32,
                                    -bound1, bound1),
        "fc1_b": jax.random.uniform(k2, (fil_num,), jnp.float32,
                                    -bound1, bound1),
        "fc2_w": jax.random.uniform(k3, (output_shape, fil_num), jnp.float32,
                                    -bound2, bound2),
        "fc2_b": jax.random.uniform(k4, (output_shape,), jnp.float32,
                                    -bound2, bound2),
        # (gamma, beta, running_mean, running_var, eps)
        "bn1": (jax.random.uniform(kg1, (in_size,), jnp.float32, 0.5, 1.5),
                0.1 * jax.random.normal(kb1, (in_size,), jnp.float32),
                0.1 * jax.random.normal(km1, (in_size,), jnp.float32),
                jax.random.uniform(kv1, (in_size,), jnp.float32, 0.5, 1.5),
                1e-5),
        "bn2": (jax.random.uniform(kg2, (fil_num,), jnp.float32, 0.5, 1.5),
                0.1 * jax.random.normal(kb2, (fil_num,), jnp.float32),
                0.1 * jax.random.normal(km2, (fil_num,), jnp.float32),
                jax.random.uniform(kv2, (fil_num,), jnp.float32, 0.5, 1.5),
                1e-5),
    }


def fold_params(params):
    """Fold bn1 (pre-fc1) and bn2 (post-fc1) into the fc1 weight/bias."""
    g1, be1, m1, v1, eps1 = params["bn1"]
    s1 = g1 * jax.lax.rsqrt(v1 + eps1)
    t1 = be1 - m1 * s1
    g2, be2, m2, v2, eps2 = params["bn2"]
    s2 = g2 * jax.lax.rsqrt(v2 + eps2)
    t2 = be2 - m2 * s2

    W1 = params["fc1_w"]                      # (F, K)
    b1 = params["fc1_b"]                      # (F,)
    # bn1(x) = x*s1 + t1 ; bn2(h) = h*s2 + t2
    w1f = (W1 * s1[None, :]).T * s2[None, :]  # (K, F)
    b1f = ((W1 @ t1) + b1) * s2 + t2          # (F,)
    w2of = params["fc2_w"]                    # (O, F) -- native orientation
    b2f = params["fc2_b"]                     # (O,)
    return w1f, b1f, w2of, b2f


def mlp_surv_ref(x, params):
    """Pure-JAX f32 reference (inference mode), for correctness checking."""
    g1, be1, m1, v1, eps1 = params["bn1"]
    y = (x - m1) * jax.lax.rsqrt(v1 + eps1) * g1 + be1
    h = y @ params["fc1_w"].T + params["fc1_b"]
    g2, be2, m2, v2, eps2 = params["bn2"]
    h = (h - m2) * jax.lax.rsqrt(v2 + eps2) * g2 + be2
    h = jnp.where(h >= 0, h, 0.01 * h)
    o = h @ params["fc2_w"].T + params["fc2_b"]
    return jax.nn.sigmoid(o)


if __name__ == "__main__":
    in_size, fil_num, output_shape, drop_rate = 93, 25, 1, 0.5
    batch = 16

    key = jax.random.PRNGKey(0)
    kx, kp = jax.random.split(key)
    x = jax.random.normal(kx, (batch, in_size), jnp.float32)
    params = make_params(kp, in_size, fil_num, output_shape)

    w1f, b1f, w2of, b2f = fold_params(params)
    out = mlp_surv_pallas(x, w1f, b1f, w2of, b2f)
    out = jax.block_until_ready(out)

    ref = mlp_surv_ref(x, params)

    assert out.shape == (batch, output_shape), out.shape
    assert bool(jnp.isfinite(out).all())
    assert bool((out > 0.0).all() and (out < 1.0).all())   # sigmoid range
    # Tolerance absorbs the bf16 cast of the first-matmul inputs.
    assert bool(jnp.allclose(out, ref, atol=1e-2, rtol=1e-2)), (
        float(jnp.abs(out - ref).max()))
    print("KERNEL_OK")
</pallas_src>

<mosaic_0001>
module attributes {stable_mosaic.version = 11 : i64} {
  func.func @_mlp_surv_kernel(%arg0: i32, %arg1: memref<16x93xbf16, #tpu.memory_space<vmem>>, %arg2: memref<93x25xbf16, #tpu.memory_space<vmem>>, %arg3: memref<1x25xf32, #tpu.memory_space<vmem>>, %arg4: memref<1x25xf32, #tpu.memory_space<vmem>>, %arg5: memref<1xf32, #tpu.memory_space<smem>>, %arg6: memref<1x16xf32, #tpu.memory_space<vmem>>) attributes {dimension_semantics = [#tpu.dimension_semantics<parallel>], iteration_bounds = array<i64: 1>, scalar_prefetch = 0 : i64, scratch_operands = 0 : i64, tpu.core_type = #tpu.core_type<tc>, window_params = [{transform_indices = @transform_0, window_bounds = array<i64: 16, 93>}, {pipeline_mode = #tpu.pipeline_mode<synchronous>, transform_indices = @transform_1, window_bounds = array<i64: 93, 25>}, {pipeline_mode = #tpu.pipeline_mode<synchronous>, transform_indices = @transform_2, window_bounds = array<i64: 1, 25>}, {pipeline_mode = #tpu.pipeline_mode<synchronous>, transform_indices = @transform_3, window_bounds = array<i64: 1, 25>}, {transform_indices = @transform_4, window_bounds = array<i64: 1>}, {transform_indices = @transform_5, window_bounds = array<i64: 1, 16>}]} {
    %c0 = arith.constant 0 : index
    %c0_0 = arith.constant 0 : index
    %0 = vector.load %arg1[%c0, %c0_0] : memref<16x93xbf16, #tpu.memory_space<vmem>>, vector<16x93xbf16>
    %c0_1 = arith.constant 0 : index
    %c0_2 = arith.constant 0 : index
    %1 = vector.load %arg2[%c0_1, %c0_2] : memref<93x25xbf16, #tpu.memory_space<vmem>>, vector<93x25xbf16>
    %cst = arith.constant dense<0.000000e+00> : vector<16x25xf32>
    %2 = tpu.matmul %0, %1, %cst {dimension_numbers = #tpu.dot_dimension_numbers<[1], [0], [0], [1], [0, 0, 1, 1], [], []>} : vector<16x93xbf16>, vector<93x25xbf16>, vector<16x25xf32> -> vector<16x25xf32>
    %c0_3 = arith.constant 0 : index
    %c0_4 = arith.constant 0 : index
    %3 = vector.load %arg3[%c0_3, %c0_4] : memref<1x25xf32, #tpu.memory_space<vmem>>, vector<1x25xf32>
    %4 = vector.broadcast %3 : vector<1x25xf32> to vector<16x25xf32>
    %5 = arith.addf %2, %4 : vector<16x25xf32>
    %cst_5 = arith.constant 0.000000e+00 : f32
    %6 = vector.broadcast %cst_5 : f32 to vector<16x25xf32>
    %7 = arith.cmpf oge, %5, %6 : vector<16x25xf32>
    %cst_6 = arith.constant 0.00999999977 : f32
    %8 = vector.broadcast %cst_6 : f32 to vector<16x25xf32>
    %9 = arith.mulf %8, %5 : vector<16x25xf32>
    %10 = arith.select %7, %5, %9 : vector<16x25xi1>, vector<16x25xf32>
    %c0_7 = arith.constant 0 : index
    %c0_8 = arith.constant 0 : index
    %11 = vector.load %arg4[%c0_7, %c0_8] : memref<1x25xf32, #tpu.memory_space<vmem>>, vector<1x25xf32>
    %cst_9 = arith.constant dense<0.000000e+00> : vector<1x16xf32>
    %12 = tpu.matmul %11, %10, %cst_9 {dimension_numbers = #tpu.dot_dimension_numbers<[1], [1], [0], [0], [0, 0, 1, 0], [], []>} : vector<1x25xf32>, vector<16x25xf32>, vector<1x16xf32> -> vector<1x16xf32>
    %c0_10 = arith.constant 0 : index
    %13 = memref.load %arg5[%c0_10] : memref<1xf32, #tpu.memory_space<smem>>
    %14 = vector.broadcast %13 : f32 to vector<1x16xf32>
    %15 = arith.addf %12, %14 : vector<1x16xf32>
    %16 = arith.negf %15 : vector<1x16xf32>
    %17 = math.exp %16 : vector<1x16xf32>
    %cst_11 = arith.constant 1.000000e+00 : f32
    %18 = vector.broadcast %cst_11 : f32 to vector<1x16xf32>
    %19 = arith.addf %18, %17 : vector<1x16xf32>
    %20 = arith.divf %18, %19 : vector<1x16xf32>
    %c0_12 = arith.constant 0 : index
    %c0_13 = arith.constant 0 : index
    %21 = vector.load %arg6[%c0_12, %c0_13] : memref<1x16xf32, #tpu.memory_space<vmem>>, vector<1x16xf32>
    tpu.vector_store %arg6[%c0_12, %c0_13], %20 {strides = array<i32>} : memref<1x16xf32, #tpu.memory_space<vmem>>, vector<1x16xf32>,
    return
  }
  func.func @transform_0(%arg0: i32) -> (i32, i32) {
    %c0_i32 = arith.constant 0 : i32
    %c0_i32_0 = arith.constant 0 : i32
    return %arg0, %c0_i32 : i32, i32
  }
  func.func @transform_1(%arg0: i32) -> (i32, i32) {
    %c0_i32 = arith.constant 0 : i32
    %c0_i32_0 = arith.constant 0 : i32
    %c0_i32_1 = arith.constant 0 : i32
    return %c0_i32, %c0_i32_0 : i32, i32
  }
  func.func @transform_2(%arg0: i32) -> (i32, i32) {
    %c0_i32 = arith.constant 0 : i32
    %c0_i32_0 = arith.constant 0 : i32
    %c0_i32_1 = arith.constant 0 : i32
    return %c0_i32, %c0_i32_0 : i32, i32
  }
  func.func @transform_3(%arg0: i32) -> (i32, i32) {
    %c0_i32 = arith.constant 0 : i32
    %c0_i32_0 = arith.constant 0 : i32
    %c0_i32_1 = arith.constant 0 : i32
    return %c0_i32, %c0_i32_0 : i32, i32
  }
  func.func @transform_4(%arg0: i32) -> i32 {
    %c0_i32 = arith.constant 0 : i32
    %c0_i32_0 = arith.constant 0 : i32
    return %c0_i32 : i32
  }
  func.func @transform_5(%arg0: i32) -> (i32, i32) {
    %c0_i32 = arith.constant 0 : i32
    %c0_i32_0 = arith.constant 0 : i32
    return %c0_i32, %arg0 : i32, i32
  }
}

</mosaic_0001>

<llo_original>
// kernel: tpu_custom_call.1
$region0: #{tpu_custom_call.1}
  #allocation0 [shape = 'u32[]', space=smem, size = 0x4, offset = 0x4, fixed_abs, tag = 'smem constant byte address 0x4 - core index']
  #allocation1 [shape = 'u32[144,128]{1,0:T(1,128)}', space=vmem, size = 0x12000, scoped, tag = 'internal scratch']
  #allocation2 [shape = 'f32[1]{0:T(128)S(6)}', space=smem, size = 0x200, scoped, tag = 'scoped memory for tpu_custom_call.1']
  %s0 = inlined_call_operand.vmem [shape: bf16[16,93], index: 0, kind: input, shape index: {}]
  %s1 = inlined_call_operand.vmem [shape: bf16[93,25], index: 1, kind: input, shape index: {}]
  %s2 = inlined_call_operand.vmem [shape: f32[1,25], index: 2, kind: input, shape index: {}]
  %s3 = inlined_call_operand.vmem [shape: f32[1,25], index: 3, kind: input, shape index: {}]
  %s4 = inlined_call_operand.<no memory space> [shape: f32[1], index: 4, kind: input, shape index: {}]
  %s5 = inlined_call_operand.hbm [shape: f32[1,16], index: 5, kind: output, shape index: {}]
  %s6 = sld [smem:[#allocation0]]
  $region30: #{tpu_custom_call.1} parent=0
    _
  %s8 = ssub.s32 1, %s6
  %s9 = scalar_select 0, %s8, %s6
  %10 = sst [smem:[#allocation2]] %s4
  $region1: #{tpu_custom_call.1} parent=0
    #allocation3 [shape = 'u8[512]{0}', space=vmem, size = 0x400, scoped, tag = 'output window, operand 0, single buffered']
    #allocation4 [shape = 's32[1]{0}', space=sflag, size = 0x4, scoped, tag = 'scoped memory for tpu_custom_call.1']
    %11 = vsyncpa [#allocation4], 0
    // Predicated region
    $region2: #{tpu_custom_call.1} parent=1 // pred_check
      _
    $region3: #{tpu_custom_call.1} parent=1 // pred_check_branch
      %13 = sbr.rel (0) target = $region5
    $region4: #{tpu_custom_call.1} parent=1 // pred_region
      _
    $region5: #{tpu_custom_call.1} parent=1 // pred_fallthru
      _
    // Predicated region
    $region6: #{tpu_custom_call.1} parent=1 // pred_check
      _
    $region7: #{tpu_custom_call.1} parent=1 // pred_check_branch
      %15 = sbr.rel (0) target = $region9
    $region8: #{tpu_custom_call.1} parent=1 // pred_region
      _
    $region9: #{tpu_custom_call.1} parent=1 // pred_fallthru
      _
    // Predicated region
    $region10: #{tpu_custom_call.1} parent=1 // pred_check
      _
    $region11: #{tpu_custom_call.1} parent=1 // pred_check_branch
      %17 = sbr.rel (0) target = $region13
    $region12: #{tpu_custom_call.1} parent=1 // pred_region
      _
    $region13: #{tpu_custom_call.1} parent=1 // pred_fallthru
      _
    // Predicated region
    $region14: #{tpu_custom_call.1} parent=1 // pred_check
      _
    $region15: #{tpu_custom_call.1} parent=1 // pred_check_branch
      %19 = sbr.rel (0) target = $region17
    $region16: #{tpu_custom_call.1} parent=1 // pred_region
      _
    $region17: #{tpu_custom_call.1} parent=1 // pred_fallthru
      _
    // Predicated region
    $region18: #{tpu_custom_call.1} parent=1 // pred_check
      _
    $region19: #{tpu_custom_call.1} parent=1 // pred_check_branch
      %21 = sbr.rel (0) target = $region21
    $region20: #{tpu_custom_call.1} parent=1 // pred_region
      _
    $region21: #{tpu_custom_call.1} parent=1 // pred_fallthru
      _
    %v23 = vld [vmem:[%s0] sm:$0xf]
    %v24 = vld [vmem:[%s0 + $0x4] sm:$0xf]
    %v25 = vld [vmem:[%s1] sm:$0xf]
    %v26 = vld [vmem:[%s1 + $0x4] sm:$0xf]
    %v27 = vld [vmem:[%s1 + $0x8] sm:$0xf]
    %v28 = vld [vmem:[%s1 + $0xc] sm:$0xf]
    %v29 = vld [vmem:[%s1 + $0x10] sm:$0xf]
    %v30 = vld [vmem:[%s1 + $0x14] sm:$0xf]
    %v31 = vld [vmem:[%s1 + $0x18] sm:$0xf]
    %v32 = vld [vmem:[%s1 + $0x1c] sm:$0xf]
    %v33 = vld [vmem:[%s1 + $0x20] sm:$0xf]
    %v34 = vld [vmem:[%s1 + $0x24] sm:$0xf]
    %v35 = vld [vmem:[%s1 + $0x28] sm:$0xf]
    %v36 = vld [vmem:[%s1 + $0x2c] sm:$0x7]
    %v37 = vld [vmem:[%s2] sm:$0x1]
    %v39 = vlaneseq
    %v40 = vshrl.u32 %v39, 7
    %v41 = vsub.s32 0, %v40
    %v42 = vrot.slane %v37, %v41
    %v46 = vunpack.c.l.b16 %v23
    %v47 = vunpack.c.l.b16 %v24
    %v48 = vpack.c.b16 %v47, %v46
    %v61 = vunpack.c.l.b16 %v25
    %v62 = vunpack.c.l.b16 %v26
    %v63 = vunpack.c.l.b16 %v27
    %v64 = vunpack.c.l.b16 %v28
    %v65 = vunpack.c.l.b16 %v29
    %v66 = vunpack.c.l.b16 %v30
    %v67 = vunpack.c.l.b16 %v31
    %v68 = vunpack.c.l.b16 %v32
    %v69 = vunpack.c.l.b16 %v33
    %v70 = vunpack.c.l.b16 %v34
    %v71 = vunpack.c.l.b16 %v35
    %v72 = vunpack.c.l.b16 %v36
    %v73 = vpack.c.b16 %v62, %v61
    %v74 = vpack.c.b16 %v64, %v63
    %v75 = vpack.c.b16 %v66, %v65
    %v76 = vpack.c.b16 %v68, %v67
    %v77 = vpack.c.b16 %v70, %v69
    %v78 = vpack.c.b16 %v72, %v71
    %vm84 = vcmask 760832
    %v86 = vsel %vm84, %v48, 0
    %vm88 = vcmask 1045504
    %vm89 = vcmask 1046528
    %v90 = vsel %vm88, 4294967295, 65535
    %v91 = vsel %vm89, %v90, 0
    %v93 = vand.u32 %v78, %v91
    %95 = vmatprep.subr.bf16.mxu0 0
    %96 = vmatpush1.bf16.msra.mxu0 %v73
    %97 = vmatprep.subr.bf16.mxu0 0
    %98 = vmatpush1.bf16.msra.mxu0 %v74
    %99 = vmatprep.subr.bf16.mxu0 0
    %100 = vmatpush1.bf16.msra.mxu0 %v75
    %101 = vmatprep.subr.bf16.mxu0 0
    %102 = vmatpush1.bf16.msra.mxu0 %v76
    %103 = vmatprep.subr.bf16.mxu0 0
    %104 = vmatpush1.bf16.msra.mxu0 %v77
    %105 = vmatprep.subr.bf16.mxu0 0
    %106 = vmatpush1.bf16.msra.mxu0 %v93
    %107 = vmatprep.subr.bf16.mxu0 0
    %108 = vmatpush1.bf16.msra.mxu0 0
    %109 = vmatprep.subr.bf16.mxu0 0
    %110 = vmatpush1.bf16.msra.mxu0 0
    %111 = vmatprep.subr.bf16.mxu0 0
    %112 = vmatpush1.bf16.msra.mxu0 0
    %113 = vmatprep.subr.bf16.mxu0 0
    %114 = vmatpush1.bf16.msra.mxu0 0
    %115 = vmatprep.subr.bf16.mxu0 0
    %116 = vmatpush1.bf16.msra.mxu0 0
    %117 = vmatprep.subr.bf16.mxu0 0
    %118 = vmatpush1.bf16.msra.mxu0 0
    %119 = vmatprep.subr.bf16.mxu0 0
    %120 = vmatpush1.bf16.msra.mxu0 0
    %121 = vmatprep.subr.bf16.mxu0 0
    %122 = vmatpush1.bf16.msra.mxu0 0
    %123 = vmatprep.subr.bf16.mxu0 0
    %124 = vmatpush1.bf16.msra.mxu0 0
    %125 = vmatprep.subr.bf16.mxu0 0
    %126 = vmatpush1.bf16.msra.mxu0 0
    %127 = vmatprep.mubr.bf16.mxu0 0
    %128 = vmatmul.mubr.bf16.gmra.mrb[0].mxu0 %v86
    %v129 = vpop.f32.mrb[0].mxu0
    %v130 = vadd.f32 %v42, %v129
    %v131 = vpop.f32.mrb[0].mxu0
    %v132 = vpop.f32.mrb[0].mxu0
    %v133 = vadd.f32 %v42, %v132
    %v134 = vpop.f32.mrb[0].mxu0
    %135 = vdwg.mxu0
    %vm136 = vcmp.ge.f32.partialorder %v130, 0.0
    %vm137 = vcmp.ge.f32.partialorder %v133, 0.0
    %v138 = vmul.f32 %v130, 0.01
    %v139 = vmul.f32 %v133, 0.01
    %v140 = vsel %vm136, %v130, %v138
    %v141 = vsel %vm137, %v133, %v139
    %v142 = vld [vmem:[%s3] sm:$0x1]
    %s143 = sld [smem:[#allocation2]]
    %v144 = vstv %s143
    %vm145 = vcmask 203776
    %v147 = vsel %vm145, %v142, 0
    %v150 = vsel %vm145, %v140, 0
    %v153 = vsel %vm145, %v141, 0
    %155 = vmatprep.subr.mxu0 0.0
    %156 = vmatpush1.xpose.msra.mxu0 %v150
    %157 = vmatprep.subr.mxu0 0.0
    %158 = vmatpush1.xpose.msra.mxu0 %v153
    %159 = vmatprep.subr.mxu0 0.0
    %160 = vmatpush1.xpose.msra.mxu0 0.0
    %161 = vmatprep.subr.mxu0 0.0
    %162 = vmatpush1.xpose.msra.mxu0 0.0
    %163 = vmatprep.subr.mxu0 0.0
    %164 = vmatpush1.xpose.msra.mxu0 0.0
    %165 = vmatprep.subr.mxu0 0.0
    %166 = vmatpush1.xpose.msra.mxu0 0.0
    %167 = vmatprep.subr.mxu0 0.0
    %168 = vmatpush1.xpose.msra.mxu0 0.0
    %169 = vmatprep.subr.mxu0 0.0
    %170 = vmatpush1.xpose.msra.mxu0 0.0
    %171 = vmatprep.subr.mxu0 0.0
    %172 = vmatpush1.xpose.msra.mxu0 0.0
    %173 = vmatprep.subr.mxu0 0.0
    %174 = vmatpush1.xpose.msra.mxu0 0.0
    %175 = vmatprep.subr.mxu0 0.0
    %176 = vmatpush1.xpose.msra.mxu0 0.0
    %177 = vmatprep.subr.mxu0 0.0
    %178 = vmatpush1.xpose.msra.mxu0 0.0
    %179 = vmatprep.subr.mxu0 0.0
    %180 = vmatpush1.xpose.msra.mxu0 0.0
    %181 = vmatprep.subr.mxu0 0.0
    %182 = vmatpush1.xpose.msra.mxu0 0.0
    %183 = vmatprep.subr.mxu0 0.0
    %184 = vmatpush1.xpose.msra.mxu0 0.0
    %185 = vmatprep.subr.mxu0 0.0
    %186 = vmatpush1.xpose.msra.mxu0 0.0
    %187 = vmatprep.subr.mxu0 0.0
    %188 = vmatpush1.xpose.msra.mxu0 0.0
    %189 = vmatprep.subr.mxu0 0.0
    %190 = vmatpush1.xpose.msra.mxu0 0.0
    %191 = vmatprep.subr.mxu0 0.0
    %192 = vmatpush1.xpose.msra.mxu0 0.0
    %193 = vmatprep.subr.mxu0 0.0
    %194 = vmatpush1.xpose.msra.mxu0 0.0
    %195 = vmatprep.subr.mxu0 0.0
    %196 = vmatpush1.xpose.msra.mxu0 0.0
    %197 = vmatprep.subr.mxu0 0.0
    %198 = vmatpush1.xpose.msra.mxu0 0.0
    %199 = vmatprep.subr.mxu0 0.0
    %200 = vmatpush1.xpose.msra.mxu0 0.0
    %201 = vmatprep.subr.mxu0 0.0
    %202 = vmatpush1.xpose.msra.mxu0 0.0
    %203 = vmatprep.subr.mxu0 0.0
    %204 = vmatpush1.xpose.msra.mxu0 0.0
    %205 = vmatprep.subr.mxu0 0.0
    %206 = vmatpush1.xpose.msra.mxu0 0.0
    %207 = vmatprep.subr.mxu0 0.0
    %208 = vmatpush1.xpose.msra.mxu0 0.0
    %209 = vmatprep.subr.mxu0 0.0
    %210 = vmatpush1.xpose.msra.mxu0 0.0
    %211 = vmatprep.subr.mxu0 0.0
    %212 = vmatpush1.xpose.msra.mxu0 0.0
    %213 = vmatprep.subr.mxu0 0.0
    %214 = vmatpush1.xpose.msra.mxu0 0.0
    %215 = vmatprep.subr.mxu0 0.0
    %216 = vmatpush1.xpose.msra.mxu0 0.0
    %217 = vmatprep.subr.mxu0 0.0
    %218 = vmatpush1.xpose.msra.mxu0 0.0
    %219 = vmatprep.mubr.f32.mxu0 0.0
    %220 = vmatmul.mubr.f32.gmra.mrb[0].mxu0 %v147
    %v221 = vpop.f32.mrb[0].mxu0
    %v222 = vadd.f32 %v144, %v221
    %v223 = vpop.f32.mrb[0].mxu0
    %224 = vdwg.mxu0
    %v225 = vxor.u32 %v222, 2147483648
    %v226 = vmul.f32 %v225, 1.442695
    %v227 = vpow.pop %v226
    %v228 = vadd.f32 %v227, 1.0
    %v229 = vrcp.pop %v228
    %v230 = vmul.f32 1.0, %v229
    %vm231 = vcmask 122880
    %232 = vst.msk [vmem:[#allocation3] sm:$0x1] %vm231, %v230
    // Predicated region
    $region22: #{tpu_custom_call.1} parent=1 // pred_check
      _
    $region23: #{tpu_custom_call.1} parent=1 // pred_check_branch
      %234 = sbr.rel (0) target = $region25
    $region24: #{tpu_custom_call.1} parent=1 // pred_region
      %s236 = ssub.s32 16, 16
      %237 = vsyncadd [#allocation4], %s236
      %s239 = sshll.u32 [#allocation3], 4
      %s240 = int_to_ptr.vmem [resolvable:$true] %s239
      %242 = dma.vmem_to_hbm [thread:$0]  %s240, 16, %s5, [#allocation4]
    $region25: #{tpu_custom_call.1} parent=1 // pred_fallthru
      _
    // Predicated region
    $region26: #{tpu_custom_call.1} parent=1 // pred_check
      _
    $region27: #{tpu_custom_call.1} parent=1 // pred_check_branch
      %244 = sbr.rel (0) target = $region29
    $region28: #{tpu_custom_call.1} parent=1 // pred_region
      %245 = dma.done [#allocation4], 16
    $region29: #{tpu_custom_call.1} parent=1 // pred_fallthru
      _
    %246 = vsyncpa [#allocation4], 1

</llo_original>
